<compile_context>
chip_gen: v5e
topology: v5e:2x2
jax: 0.10.0
libtpu: 0.0.40
codegen_flags: <defaults>
</compile_context>

<pallas_src>
import jax
import jax.numpy as jnp
from jax import lax
from jax.experimental import pallas as pl
from jax.experimental.pallas import tpu as pltpu

INPUT_SIZE = 5
OUTPUT_SIZE = 2

ROW_GROUP = 128          # rows packed per lane-dense group: 128*5=640 / 128*2=256 lanes
_PACKED_MIN_ROWS = 2048  # below this the whole problem is a few KiB: skip the grid


# --------------------------------------------------------------------------- #
# Small-batch kernel: no grid, unrolled VPU math, parameters as SMEM scalars. #
# --------------------------------------------------------------------------- #
def _linear_small_kernel(x_ref, w_ref, b_ref, o_ref):
    # x_ref: (B, in_f) VMEM; w_ref: (out_f, in_f) SMEM; b_ref: (out_f,) SMEM.
    # out_f=2 / in_f=5 are compile-time constants -> fully unrolled multiply-add
    # on the VPU (exact f32; no MXU fill/drain, no padded parameter VMEM tiles).
    x = x_ref[...]
    in_f = x.shape[1]
    out_f = o_ref.shape[1]
    for j in range(out_f):
        acc = x[:, 0:1] * w_ref[j, 0]
        for k in range(1, in_f):
            acc = acc + x[:, k:k + 1] * w_ref[j, k]
        o_ref[:, j:j + 1] = (acc + b_ref[j]).astype(o_ref.dtype)


def _linear_small(x, weight, bias):
    B, in_f = x.shape
    out_f = weight.shape[0]
    cost = pl.CostEstimate(
        flops=2 * B * in_f * out_f,
        transcendentals=0,
        bytes_accessed=4 * (B * in_f + out_f * in_f + out_f + B * out_f),
    )
    return pl.pallas_call(
        _linear_small_kernel,
        out_shape=jax.ShapeDtypeStruct((B, out_f), x.dtype),
        in_specs=[
            pl.BlockSpec(memory_space=pltpu.MemorySpace.VMEM),
            pl.BlockSpec(memory_space=pltpu.MemorySpace.SMEM),
            pl.BlockSpec(memory_space=pltpu.MemorySpace.SMEM),
        ],
        out_specs=pl.BlockSpec(memory_space=pltpu.MemorySpace.VMEM),
        cost_estimate=cost,
    )(x, weight, bias)


# --------------------------------------------------------------------------- #
# Streaming kernel: lane-dense packed rows, one dense block-diagonal matmul.  #
# --------------------------------------------------------------------------- #
def _linear_packed_kernel(xg_ref, m_ref, bt_ref, og_ref):
    # xg_ref: (blk, 128*in_f)        lane-dense packed input rows
    # m_ref : (128*in_f, 128*out_f)  kron(I_128, W^T), VMEM-resident across steps
    # bt_ref: (1, 128*out_f)         lane-tiled bias
    # og_ref: (blk, 128*out_f)       lane-dense packed output rows (unmasked vst)
    og_ref[...] = (
        jnp.dot(xg_ref[...], m_ref[...],
                preferred_element_type=jnp.float32,
                precision=lax.Precision.HIGHEST)  # exact-f32 vs. nn.Linear reference
        + bt_ref[...]
    ).astype(og_ref.dtype)


def _choose_group_block(n_groups):
    # >=4 grid steps when possible so the "parallel" batch axis can shard across
    # both v7x TensorCores; cap the block so per-step HBM traffic is ~1-4 MiB
    # (amortizes the ~0.35us/step pipeline overhead on single-TC v5e/v6e) while
    # the dense-packed, double-buffered VMEM footprint stays at a few MiB
    # (well under v7x's 64 MiB physical / every chip's 32 MiB scoped default).
    blk = max(16, pl.cdiv(n_groups, 4))
    blk = min(blk, 1024)                 # 1024 groups = 131072 rows ~= 3.5 MiB/step
    return max(8, (blk // 8) * 8)        # keep sublane (8) alignment


def _linear_packed(x, weight, bias):
    B, in_f = x.shape
    out_f = weight.shape[0]

    # Zero-pad the row count to a multiple of the 128-row packing group; padded
    # rows are sliced off again below.  Any remaining non-divisibility by the
    # block is handled by a masked last grid block, so large batches never fall
    # back to an all-in-VMEM mapping.
    pad = (-B) % ROW_GROUP
    if pad:
        x = jnp.pad(x, ((0, pad), (0, 0)))
    n_groups = (B + pad) // ROW_GROUP

    # Layout-preserving (row-major) reshape: x[128r + c, k] == xg[r, in_f*c + k].
    xg = x.reshape(n_groups, ROW_GROUP * in_f)

    # Block-diagonal packed weight: kron(I_128, W^T)[in_f*c + k, out_f*c + j] = W[j, k],
    # so one dense (640, 256) MXU matmul applies the 5->2 map to all 128 packed rows.
    m = jnp.kron(jnp.eye(ROW_GROUP, dtype=x.dtype), weight.T)
    bt = jnp.tile(bias, ROW_GROUP)[None, :]

    blk = _choose_group_block(n_groups)
    grid = (pl.cdiv(n_groups, blk),)
    cost = pl.CostEstimate(
        flops=2 * n_groups * (ROW_GROUP * in_f) * (ROW_GROUP * out_f),
        transcendentals=0,
        bytes_accessed=4 * (xg.size + m.size + bt.size
                            + n_groups * ROW_GROUP * out_f),
    )

    out_g = pl.pallas_call(
        _linear_packed_kernel,
        out_shape=jax.ShapeDtypeStruct((n_groups, ROW_GROUP * out_f), x.dtype),
        grid=grid,
        in_specs=[
            pl.BlockSpec((blk, ROW_GROUP * in_f), lambda i: (i, 0)),
            pl.BlockSpec((ROW_GROUP * in_f, ROW_GROUP * out_f), lambda i: (0, 0)),
            pl.BlockSpec((1, ROW_GROUP * out_f), lambda i: (0, 0)),
        ],
        out_specs=pl.BlockSpec((blk, ROW_GROUP * out_f), lambda i: (i, 0)),
        compiler_params=pltpu.CompilerParams(
            dimension_semantics=("parallel",)),
        cost_estimate=cost,
    )(xg, m, bt)

    # Layout-preserving reshape back to nn.Linear's (B, out_f); drop padded rows.
    out = out_g.reshape(n_groups * ROW_GROUP, out_f)
    return out[:B] if pad else out


def linear_pallas(x, weight, bias):
    """y = x @ weight.T + bias (matches torch.nn.Linear forward).

    x: (B, in_features) f32; weight: (out_features, in_features) f32 (PyTorch
    layout, never transposed host-side); bias: (out_features,) f32.
    """
    B = x.shape[0]
    if B >= _PACKED_MIN_ROWS:
        return _linear_packed(x, weight, bias)
    return _linear_small(x, weight, bias)


_linear_jit = jax.jit(linear_pallas)


def model_forward(x, weight, bias):
    # Mirrors Model.forward, including its size print (host-side, not in-kernel).
    out = _linear_jit(x, weight, bias)
    print("\tIn Model: input size", tuple(x.shape), "output size", tuple(out.shape))
    return out


if __name__ == "__main__":
    key = jax.random.PRNGKey(0)
    kx, kw, kb, kx2, kx3 = jax.random.split(key, 5)

    # nn.Linear-style U(-1/sqrt(in_f), 1/sqrt(in_f)) parameters.
    bound = 1.0 / (INPUT_SIZE ** 0.5)
    weight = jax.random.uniform(kw, (OUTPUT_SIZE, INPUT_SIZE),
                                minval=-bound, maxval=bound, dtype=jnp.float32)
    bias = jax.random.uniform(kb, (OUTPUT_SIZE,),
                              minval=-bound, maxval=bound, dtype=jnp.float32)

    def reference(xx):
        return jnp.dot(xx, weight.T, precision=lax.Precision.HIGHEST) + bias

    # --- small batch (test-harness scale): no-grid VPU/SMEM path ---
    x = jax.random.normal(kx, (8, INPUT_SIZE), dtype=jnp.float32)
    out = jax.block_until_ready(model_forward(x, weight, bias))
    assert out.shape == (8, OUTPUT_SIZE)
    assert jnp.allclose(out, reference(x), atol=1e-5, rtol=1e-5)

    # --- large batch, multiple of the packing group: lane-dense streaming path ---
    xb = jax.random.normal(kx2, (8192, INPUT_SIZE), dtype=jnp.float32)
    outb = jax.block_until_ready(model_forward(xb, weight, bias))
    assert outb.shape == (8192, OUTPUT_SIZE)
    assert jnp.allclose(outb, reference(xb), atol=1e-5, rtol=1e-5)

    # --- large batch NOT divisible by group/block: zero-pad + masked last block ---
    xc = jax.random.normal(kx3, (5000, INPUT_SIZE), dtype=jnp.float32)
    outc = jax.block_until_ready(model_forward(xc, weight, bias))
    assert outc.shape == (5000, OUTPUT_SIZE)
    assert jnp.allclose(outc, reference(xc), atol=1e-5, rtol=1e-5)

    print("KERNEL_OK")
</pallas_src>

<mosaic_0001>
module attributes {stable_mosaic.version = 11 : i64} {
  func.func @_linear_small_kernel(%arg0: memref<8x5xf32, #tpu.memory_space<vmem>>, %arg1: memref<2x5xf32, #tpu.memory_space<smem>>, %arg2: memref<2xf32, #tpu.memory_space<smem>>, %arg3: memref<8x2xf32, #tpu.memory_space<vmem>>) attributes {dimension_semantics = [], scalar_prefetch = 0 : i64, scratch_operands = 0 : i64, tpu.core_type = #tpu.core_type<tc>} {
    %c0 = arith.constant 0 : index
    %c0_0 = arith.constant 0 : index
    %0 = vector.load %arg0[%c0, %c0_0] : memref<8x5xf32, #tpu.memory_space<vmem>>, vector<8x5xf32>
    %1 = vector.extract_strided_slice %0 {offsets = [0, 0], sizes = [8, 1], strides = [1, 1]} : vector<8x5xf32> to vector<8x1xf32>
    %c0_1 = arith.constant 0 : index
    %c0_2 = arith.constant 0 : index
    %2 = memref.load %arg1[%c0_1, %c0_2] : memref<2x5xf32, #tpu.memory_space<smem>>
    %3 = vector.broadcast %2 : f32 to vector<8x1xf32>
    %4 = arith.mulf %1, %3 : vector<8x1xf32>
    %5 = vector.extract_strided_slice %0 {offsets = [0, 1], sizes = [8, 1], strides = [1, 1]} : vector<8x5xf32> to vector<8x1xf32>
    %c0_3 = arith.constant 0 : index
    %c1 = arith.constant 1 : index
    %6 = memref.load %arg1[%c0_3, %c1] : memref<2x5xf32, #tpu.memory_space<smem>>
    %7 = vector.broadcast %6 : f32 to vector<8x1xf32>
    %8 = arith.mulf %5, %7 : vector<8x1xf32>
    %9 = arith.addf %4, %8 : vector<8x1xf32>
    %10 = vector.extract_strided_slice %0 {offsets = [0, 2], sizes = [8, 1], strides = [1, 1]} : vector<8x5xf32> to vector<8x1xf32>
    %c0_4 = arith.constant 0 : index
    %c2 = arith.constant 2 : index
    %11 = memref.load %arg1[%c0_4, %c2] : memref<2x5xf32, #tpu.memory_space<smem>>
    %12 = vector.broadcast %11 : f32 to vector<8x1xf32>
    %13 = arith.mulf %10, %12 : vector<8x1xf32>
    %14 = arith.addf %9, %13 : vector<8x1xf32>
    %15 = vector.extract_strided_slice %0 {offsets = [0, 3], sizes = [8, 1], strides = [1, 1]} : vector<8x5xf32> to vector<8x1xf32>
    %c0_5 = arith.constant 0 : index
    %c3 = arith.constant 3 : index
    %16 = memref.load %arg1[%c0_5, %c3] : memref<2x5xf32, #tpu.memory_space<smem>>
    %17 = vector.broadcast %16 : f32 to vector<8x1xf32>
    %18 = arith.mulf %15, %17 : vector<8x1xf32>
    %19 = arith.addf %14, %18 : vector<8x1xf32>
    %20 = vector.extract_strided_slice %0 {offsets = [0, 4], sizes = [8, 1], strides = [1, 1]} : vector<8x5xf32> to vector<8x1xf32>
    %c0_6 = arith.constant 0 : index
    %c4 = arith.constant 4 : index
    %21 = memref.load %arg1[%c0_6, %c4] : memref<2x5xf32, #tpu.memory_space<smem>>
    %22 = vector.broadcast %21 : f32 to vector<8x1xf32>
    %23 = arith.mulf %20, %22 : vector<8x1xf32>
    %24 = arith.addf %19, %23 : vector<8x1xf32>
    %c0_7 = arith.constant 0 : index
    %25 = memref.load %arg2[%c0_7] : memref<2xf32, #tpu.memory_space<smem>>
    %26 = vector.broadcast %25 : f32 to vector<8x1xf32>
    %27 = arith.addf %24, %26 : vector<8x1xf32>
    %c0_8 = arith.constant 0 : index
    %c0_9 = arith.constant 0 : index
    %28 = vector.load %arg3[%c0_8, %c0_9] : memref<8x2xf32, #tpu.memory_space<vmem>>, vector<8x1xf32>
    tpu.vector_store %arg3[%c0_8, %c0_9], %27 {strides = array<i32>} : memref<8x2xf32, #tpu.memory_space<vmem>>, vector<8x1xf32>,
    %29 = vector.extract_strided_slice %0 {offsets = [0, 0], sizes = [8, 1], strides = [1, 1]} : vector<8x5xf32> to vector<8x1xf32>
    %c1_10 = arith.constant 1 : index
    %c0_11 = arith.constant 0 : index
    %30 = memref.load %arg1[%c1_10, %c0_11] : memref<2x5xf32, #tpu.memory_space<smem>>
    %31 = vector.broadcast %30 : f32 to vector<8x1xf32>
    %32 = arith.mulf %29, %31 : vector<8x1xf32>
    %33 = vector.extract_strided_slice %0 {offsets = [0, 1], sizes = [8, 1], strides = [1, 1]} : vector<8x5xf32> to vector<8x1xf32>
    %c1_12 = arith.constant 1 : index
    %c1_13 = arith.constant 1 : index
    %34 = memref.load %arg1[%c1_12, %c1_13] : memref<2x5xf32, #tpu.memory_space<smem>>
    %35 = vector.broadcast %34 : f32 to vector<8x1xf32>
    %36 = arith.mulf %33, %35 : vector<8x1xf32>
    %37 = arith.addf %32, %36 : vector<8x1xf32>
    %38 = vector.extract_strided_slice %0 {offsets = [0, 2], sizes = [8, 1], strides = [1, 1]} : vector<8x5xf32> to vector<8x1xf32>
    %c1_14 = arith.constant 1 : index
    %c2_15 = arith.constant 2 : index
    %39 = memref.load %arg1[%c1_14, %c2_15] : memref<2x5xf32, #tpu.memory_space<smem>>
    %40 = vector.broadcast %39 : f32 to vector<8x1xf32>
    %41 = arith.mulf %38, %40 : vector<8x1xf32>
    %42 = arith.addf %37, %41 : vector<8x1xf32>
    %43 = vector.extract_strided_slice %0 {offsets = [0, 3], sizes = [8, 1], strides = [1, 1]} : vector<8x5xf32> to vector<8x1xf32>
    %c1_16 = arith.constant 1 : index
    %c3_17 = arith.constant 3 : index
    %44 = memref.load %arg1[%c1_16, %c3_17] : memref<2x5xf32, #tpu.memory_space<smem>>
    %45 = vector.broadcast %44 : f32 to vector<8x1xf32>
    %46 = arith.mulf %43, %45 : vector<8x1xf32>
    %47 = arith.addf %42, %46 : vector<8x1xf32>
    %48 = vector.extract_strided_slice %0 {offsets = [0, 4], sizes = [8, 1], strides = [1, 1]} : vector<8x5xf32> to vector<8x1xf32>
    %c1_18 = arith.constant 1 : index
    %c4_19 = arith.constant 4 : index
    %49 = memref.load %arg1[%c1_18, %c4_19] : memref<2x5xf32, #tpu.memory_space<smem>>
    %50 = vector.broadcast %49 : f32 to vector<8x1xf32>
    %51 = arith.mulf %48, %50 : vector<8x1xf32>
    %52 = arith.addf %47, %51 : vector<8x1xf32>
    %c1_20 = arith.constant 1 : index
    %53 = memref.load %arg2[%c1_20] : memref<2xf32, #tpu.memory_space<smem>>
    %54 = vector.broadcast %53 : f32 to vector<8x1xf32>
    %55 = arith.addf %52, %54 : vector<8x1xf32>
    %c0_21 = arith.constant 0 : index
    %c1_22 = arith.constant 1 : index
    %56 = vector.load %arg3[%c0_21, %c1_22] : memref<8x2xf32, #tpu.memory_space<vmem>>, vector<8x1xf32>
    tpu.vector_store %arg3[%c0_21, %c1_22], %55 {strides = array<i32>} : memref<8x2xf32, #tpu.memory_space<vmem>>, vector<8x1xf32>,
    return
  }
}

</mosaic_0001>

<llo_original>
// kernel: linear_pallas.1
$region0: #{linear_pallas.1}
  #allocation0 [shape = 'u32[]', space=smem, size = 0x4, offset = 0x4, fixed_abs, tag = 'smem constant byte address 0x4 - core index']
  #allocation1 [shape = 'u32[72,128]{1,0:T(1,128)}', space=vmem, size = 0x9000, scoped, tag = 'internal scratch']
  %s0 = inlined_call_operand.hbm [shape: f32[8,5], index: 0, kind: input, shape index: {}]
  %s1 = inlined_call_operand.hbm [shape: f32[2,5], index: 1, kind: input, shape index: {}]
  %s2 = inlined_call_operand.vmem [shape: f32[2], index: 2, kind: input, shape index: {}]
  %s3 = inlined_call_operand.vmem [shape: f32[8,2], index: 3, kind: output, shape index: {}]
  %s4 = sld [smem:[#allocation0]]
  $region34: #{linear_pallas.1} parent=0
    _
  %s6 = ssub.s32 1, %s4
  %s7 = scalar_select 0, %s6, %s4
  $region1: #{linear_pallas.1} parent=0
    #allocation2 [shape = 'u8[4096]{0}', space=vmem, size = 0x1000, scoped, tag = 'input window, operand 0, single buffered']
    #allocation3 [shape = 's32[1]{0}', space=sflag, size = 0x4, scoped, tag = 'scoped memory for linear_pallas.1']
    #allocation4 [shape = 's32[1]{0}', space=sflag, size = 0x4, scoped, tag = 'scoped memory for linear_pallas.1']
    #allocation5 [shape = 's32[1]{0}', space=sflag, size = 0x4, scoped, tag = 'scoped memory for linear_pallas.1']
    #allocation6 [shape = 'u8[1024]{0}', space=smem, size = 0x400, scoped, tag = 'input window, operand 1, single buffered']
    #allocation7 [shape = 'u8[512]{0}', space=smem, size = 0x200, scoped, tag = 'input window, operand 2, single buffered']
    %8 = vsyncpa [#allocation3], 0
    %9 = vsyncpa [#allocation4], 0
    %10 = vsyncpa [#allocation5], 0
    // Predicated region
    $region2: #{linear_pallas.1} parent=1 // pred_check
      _
    $region3: #{linear_pallas.1} parent=1 // pred_check_branch
      %12 = sbr.rel (0) target = $region5
    $region4: #{linear_pallas.1} parent=1 // pred_region
      %14 = vsyncadd [#allocation3], 0
      %s16 = sshll.u32 %s0, 4
      %s17 = int_to_ptr.hbm [resolvable:$true] %s16
      %s18 = sshll.u32 [#allocation2], 4
      %s19 = int_to_ptr.vmem [resolvable:$true] %s18
      %21 = dma.hbm_to_vmem [thread:$0]  %s17, 128, %s19, [#allocation3]
    $region5: #{linear_pallas.1} parent=1 // pred_fallthru
      _
    // Predicated region
    $region6: #{linear_pallas.1} parent=1 // pred_check
      _
    $region7: #{linear_pallas.1} parent=1 // pred_check_branch
      %23 = sbr.rel (0) target = $region9
    $region8: #{linear_pallas.1} parent=1 // pred_region
      %25 = vsyncadd [#allocation4], 0
      %s27 = sshll.u32 %s1, 4
      %s28 = int_to_ptr.hbm [resolvable:$true] %s27
      %30 = dma.hbm_to_smem %s28, 32, [#allocation6], [#allocation4]
    $region9: #{linear_pallas.1} parent=1 // pred_fallthru
      _
    // Predicated region
    $region10: #{linear_pallas.1} parent=1 // pred_check
      _
    $region11: #{linear_pallas.1} parent=1 // pred_check_branch
      %32 = sbr.rel (0) target = $region13
    $region12: #{linear_pallas.1} parent=1 // pred_region
      %34 = vsyncadd [#allocation5], 0
      %s36 = sshll.u32 %s2, 4
      %s37 = int_to_ptr.vmem [resolvable:$true] %s36
      %39 = dma.vmem_to_smem %s37, 16, [#allocation7], [#allocation5]
    $region13: #{linear_pallas.1} parent=1 // pred_fallthru
      _
    // Predicated region
    $region14: #{linear_pallas.1} parent=1 // pred_check
      _
    $region15: #{linear_pallas.1} parent=1 // pred_check_branch
      %41 = sbr.rel (0) target = $region17
    $region16: #{linear_pallas.1} parent=1 // pred_region
      %43 = dma.done [#allocation3], 128
    $region17: #{linear_pallas.1} parent=1 // pred_fallthru
      _
    // Predicated region
    $region18: #{linear_pallas.1} parent=1 // pred_check
      _
    $region19: #{linear_pallas.1} parent=1 // pred_check_branch
      %45 = sbr.rel (0) target = $region21
    $region20: #{linear_pallas.1} parent=1 // pred_region
      %47 = dma.done [#allocation4], 32
    $region21: #{linear_pallas.1} parent=1 // pred_fallthru
      _
    // Predicated region
    $region22: #{linear_pallas.1} parent=1 // pred_check
      _
    $region23: #{linear_pallas.1} parent=1 // pred_check_branch
      %49 = sbr.rel (0) target = $region25
    $region24: #{linear_pallas.1} parent=1 // pred_region
      %51 = dma.done [#allocation5], 16
    $region25: #{linear_pallas.1} parent=1 // pred_fallthru
      _
    %52 = sfence
    %v53 = vld [vmem:[#allocation2] sm:$0xff]
    %s54 = sld [smem:[#allocation6]]
    %v55 = vstv %s54
    %v56 = vmul.f32 %v53, %v55
    %s57 = sld [smem:[#allocation6 + $0x1]]
    %v58 = vstv %s57
    %v59 = vmul.f32 %v53, %v58
    %61 = vrot.lane.b32.xlu0 %v59, 127
    %v62 = vpop.permute.xlu0 %61
    %v64 = vadd.f32 %v56, %v62
    %s65 = sld [smem:[#allocation6 + $0x2]]
    %v66 = vstv %s65
    %v67 = vmul.f32 %v53, %v66
    %69 = vrot.lane.b32.xlu0 %v67, 126
    %v70 = vpop.permute.xlu0 %69
    %v72 = vadd.f32 %v64, %v70
    %s73 = sld [smem:[#allocation6 + $0x3]]
    %v74 = vstv %s73
    %v75 = vmul.f32 %v53, %v74
    %77 = vrot.lane.b32.xlu0 %v75, 125
    %v78 = vpop.permute.xlu0 %77
    %v80 = vadd.f32 %v72, %v78
    %s81 = sld [smem:[#allocation6 + $0x4]]
    %v82 = vstv %s81
    %v83 = vmul.f32 %v53, %v82
    %85 = vrot.lane.b32.xlu0 %v83, 124
    %v86 = vpop.permute.xlu0 %85
    %v88 = vadd.f32 %v80, %v86
    %s89 = sld [smem:[#allocation7]]
    %v90 = vstv %s89
    %v91 = vadd.f32 %v88, %v90
    %vm92 = vcmask 7168
    %93 = vst.msk [vmem:[%s3] sm:$0xff] %vm92, %v91
    %s94 = sld [smem:[#allocation6 + $0x80]]
    %v95 = vstv %s94
    %v96 = vmul.f32 %v53, %v95
    %s97 = sld [smem:[#allocation6 + $0x81]]
    %v98 = vstv %s97
    %v99 = vmul.f32 %v53, %v98
    %101 = vrot.lane.b32.xlu0 %v99, 127
    %v102 = vpop.permute.xlu0 %101
    %v104 = vadd.f32 %v96, %v102
    %s105 = sld [smem:[#allocation6 + $0x82]]
    %v106 = vstv %s105
    %v107 = vmul.f32 %v53, %v106
    %109 = vrot.lane.b32.xlu0 %v107, 126
    %v110 = vpop.permute.xlu0 %109
    %v112 = vadd.f32 %v104, %v110
    %s113 = sld [smem:[#allocation6 + $0x83]]
    %v114 = vstv %s113
    %v115 = vmul.f32 %v53, %v114
    %117 = vrot.lane.b32.xlu0 %v115, 125
    %v118 = vpop.permute.xlu0 %117
    %v120 = vadd.f32 %v112, %v118
    %s121 = sld [smem:[#allocation6 + $0x84]]
    %v122 = vstv %s121
    %v123 = vmul.f32 %v53, %v122
    %125 = vrot.lane.b32.xlu0 %v123, 124
    %v126 = vpop.permute.xlu0 %125
    %v128 = vadd.f32 %v120, %v126
    %s129 = sld [smem:[#allocation7 + $0x1]]
    %v130 = vstv %s129
    %v131 = vadd.f32 %v128, %v130
    %133 = vrot.lane.b32.xlu0 %v131, 1
    %v134 = vpop.permute.xlu0 %133
    %vm136 = vcmask 15368
    %137 = vst.msk [vmem:[%s3] sm:$0xff] %vm136, %v134
    // Predicated region
    $region26: #{linear_pallas.1} parent=1 // pred_check
      _
    $region27: #{linear_pallas.1} parent=1 // pred_check_branch
      %139 = sbr.rel (0) target = $region29
    $region28: #{linear_pallas.1} parent=1 // pred_region
      _
    $region29: #{linear_pallas.1} parent=1 // pred_fallthru
      _
    // Predicated region
    $region30: #{linear_pallas.1} parent=1 // pred_check
      _
    $region31: #{linear_pallas.1} parent=1 // pred_check_branch
      %141 = sbr.rel (0) target = $region33
    $region32: #{linear_pallas.1} parent=1 // pred_region
      _
    $region33: #{linear_pallas.1} parent=1 // pred_fallthru
      _
    %142 = vsyncpa [#allocation3], 1
    %143 = vsyncpa [#allocation4], 1
    %144 = vsyncpa [#allocation5], 1

</llo_original>
